<compile_context>
chip_gen: v7x
topology: tpu7x:2x2x1
jax: 0.10.0
libtpu: 0.0.40
codegen_flags: <defaults>
</compile_context>

<pallas_src>
import jax
import jax.numpy as jnp
from jax import lax
from jax.experimental import pallas as pl
from jax.experimental.pallas import tpu as pltpu

_LANE = 128
_SUBLANE = 8


def extropic_alignment_kernel(x_ref, w_ref, b_ref, o_ref):
    # x_ref: (TB, D)  w_ref: (M, D)  b_ref: (M, 1)  o_ref: (M, TB)
    x = x_ref[...]
    w = w_ref[...]
    b = b_ref[...]

    # logits^T = W @ x^T + b : contract dim 1 (D) of both operands, so the
    # weight keeps its PyTorch [num_metrics, input_dim] layout and the batch
    # dim lands on the 128-lane axis of the result (lane-dense everything
    # downstream). f32 accumulation on the MXU.
    logits = lax.dot_general(
        w, x,
        dimension_numbers=(((1,), (1,)), ((), ())),
        preferred_element_type=jnp.float32,
    ) + b

    # Numerically-stable softmax along the metric axis (sublane axis, size M).
    m = jnp.max(logits, axis=0, keepdims=True)
    e = jnp.exp(logits - m)
    denom = jnp.sum(e, axis=0, keepdims=True)
    # Exact divide: kernel is DMA-bound, the VPU divide is hidden for free
    # and keeps row sums at 1.0 to float eps.
    o_ref[...] = (e / denom).astype(o_ref.dtype)


def _pad_to(n, mult):
    return ((n + mult - 1) // mult) * mult


def _choose_batch_tile(B, D, M, tile_budget_bytes=24 << 20):
    """Pick the batch tile from a lane-padding-aware VMEM byte budget.

    Per batch row of live (double-buffered) tiles:
      x tile  (TB, D): minor dim padded to 128 lanes  -> 128*4 B/row/buffer
      out tile (M, TB): M padded to 8 sublanes         ->   8*4 B/row/buffer
    Weight/bias are resident and tiny (<= 8 KiB padded).
    """
    d_pad = _pad_to(D, _LANE)
    m_pad = _pad_to(M, _SUBLANE)
    per_row = 2 * d_pad * 4 + 2 * m_pad * 4
    tb = tile_budget_bytes // per_row

    # Keep >= 4 grid steps when B is large enough: >=2 steps per TensorCore on
    # v7x megacore plus real DMA/compute overlap on every generation.
    if B // 4 >= 1024:
        tb = min(tb, B // 4)

    tb = max(_LANE, (tb // _LANE) * _LANE)  # lane-dim of the (M, TB) out block
    if B <= tb:
        return B  # single tile == full array dim (always a legal block)
    return tb


@jax.jit
def extropic_alignment(x, weight, bias):
    """x: [B, D] f32, weight: [M, D] f32 (PyTorch layout), bias: [M] f32."""
    B, D = x.shape
    M = weight.shape[0]
    b2 = bias.reshape(M, 1)  # broadcasts over the lane (batch) axis in-kernel

    TB = _choose_batch_tile(B, D, M)
    grid = (pl.cdiv(B, TB),)

    # Padded VMEM footprint (double-buffered tiles + resident weight/bias),
    # plus headroom; capped comfortably below v7x's 64 MiB physical VMEM.
    d_pad = _pad_to(D, _LANE)
    m_pad = _pad_to(M, _SUBLANE)
    need = (2 * TB * d_pad * 4          # x tiles (lane-padded)
            + 2 * m_pad * TB * 4        # out tiles (sublane-padded)
            + m_pad * d_pad * 4         # resident weight
            + m_pad * _LANE * 4)        # resident bias
    vmem_limit = int(min(max(need + (6 << 20), 12 << 20), 40 << 20))

    out_t = pl.pallas_call(
        extropic_alignment_kernel,
        out_shape=jax.ShapeDtypeStruct((M, B), jnp.float32),
        grid_spec=pltpu.PrefetchScalarGridSpec(
            num_scalar_prefetch=0,
            grid=grid,
            in_specs=[
                pl.BlockSpec((TB, D), lambda i: (i, 0)),   # tiled, double-buffered
                pl.BlockSpec((M, D), lambda i: (0, 0)),    # resident across grid
                pl.BlockSpec((M, 1), lambda i: (0, 0)),    # resident across grid
            ],
            out_specs=pl.BlockSpec((M, TB), lambda i: (0, i)),  # lane-dense store
        ),
        compiler_params=pltpu.CompilerParams(
            dimension_semantics=("parallel",),  # 2x on v7x megacore, neutral elsewhere
            vmem_limit_bytes=vmem_limit,
        ),
    )(x, weight, b2)

    # Tiny layout plumbing back to the PyTorch (B, M) contract.
    return out_t.T


if __name__ == "__main__":
    input_dim, num_metrics = 32, 4

    key = jax.random.PRNGKey(0)
    kx, kw, kb, kx2 = jax.random.split(key, 4)

    # Deterministic init matching nn.Linear's uniform(-1/sqrt(in), 1/sqrt(in))
    bound = 1.0 / jnp.sqrt(jnp.float32(input_dim))
    weight = jax.random.uniform(kw, (num_metrics, input_dim), jnp.float32,
                                minval=-bound, maxval=bound)
    bias = jax.random.uniform(kb, (num_metrics,), jnp.float32,
                              minval=-bound, maxval=bound)

    # Small batch consistent with the module (single-tile path).
    batch = 8
    x = jax.random.normal(kx, (batch, input_dim), jnp.float32)
    out = extropic_alignment(x, weight, bias)
    jax.block_until_ready(out)

    ref = jax.nn.softmax(x @ weight.T + bias, axis=-1)
    assert out.shape == (batch, num_metrics)
    assert jnp.allclose(out, ref, atol=1e-4, rtol=1e-4)
    assert jnp.allclose(jnp.sum(out, axis=-1), 1.0, atol=1e-4)

    # Larger batch exercises the multi-step pipelined grid (4 tiles of 2048).
    big_batch = 8192
    x_big = jax.random.normal(kx2, (big_batch, input_dim), jnp.float32)
    out_big = extropic_alignment(x_big, weight, bias)
    jax.block_until_ready(out_big)

    ref_big = jax.nn.softmax(x_big @ weight.T + bias, axis=-1)
    assert out_big.shape == (big_batch, num_metrics)
    assert jnp.allclose(out_big, ref_big, atol=1e-4, rtol=1e-4)
    assert jnp.allclose(jnp.sum(out_big, axis=-1), 1.0, atol=1e-4)

    print("KERNEL_OK")
</pallas_src>

<mosaic_0001>
module attributes {stable_mosaic.version = 11 : i64} {
  func.func @extropic_alignment_kernel(%arg0: i32, %arg1: memref<8x32xf32, #tpu.memory_space<vmem>>, %arg2: memref<4x32xf32, #tpu.memory_space<vmem>>, %arg3: memref<4x1xf32, #tpu.memory_space<vmem>>, %arg4: memref<4x8xf32, #tpu.memory_space<vmem>>) attributes {dimension_semantics = [#tpu.dimension_semantics<parallel>], iteration_bounds = array<i64: 1>, scalar_prefetch = 0 : i64, scratch_operands = 0 : i64, tpu.core_type = #tpu.core_type<tc>, window_params = [{transform_indices = @transform_0, window_bounds = array<i64: 8, 32>}, {pipeline_mode = #tpu.pipeline_mode<synchronous>, transform_indices = @transform_1, window_bounds = array<i64: 4, 32>}, {pipeline_mode = #tpu.pipeline_mode<synchronous>, transform_indices = @transform_2, window_bounds = array<i64: 4, 1>}, {transform_indices = @transform_3, window_bounds = array<i64: 4, 8>}]} {
    %c0 = arith.constant 0 : index
    %c0_0 = arith.constant 0 : index
    %0 = vector.load %arg1[%c0, %c0_0] : memref<8x32xf32, #tpu.memory_space<vmem>>, vector<8x32xf32>
    %c0_1 = arith.constant 0 : index
    %c0_2 = arith.constant 0 : index
    %1 = vector.load %arg2[%c0_1, %c0_2] : memref<4x32xf32, #tpu.memory_space<vmem>>, vector<4x32xf32>
    %c0_3 = arith.constant 0 : index
    %c0_4 = arith.constant 0 : index
    %2 = vector.load %arg3[%c0_3, %c0_4] : memref<4x1xf32, #tpu.memory_space<vmem>>, vector<4x1xf32>
    %cst = arith.constant dense<0.000000e+00> : vector<4x8xf32>
    %3 = tpu.matmul %1, %0, %cst {dimension_numbers = #tpu.dot_dimension_numbers<[1], [1], [0], [0], [0, 0, 1, 0], [], []>} : vector<4x32xf32>, vector<8x32xf32>, vector<4x8xf32> -> vector<4x8xf32>
    %4 = vector.broadcast %2 : vector<4x1xf32> to vector<4x8xf32>
    %5 = arith.addf %3, %4 : vector<4x8xf32>
    %cst_5 = arith.constant dense<0xFF800000> : vector<8xf32>
    %6 = vector.multi_reduction <maximumf>, %5, %cst_5 [0] : vector<4x8xf32> to vector<8xf32>
    %7 = vector.shape_cast %6 : vector<8xf32> to vector<1x8xf32>
    %8 = vector.broadcast %7 : vector<1x8xf32> to vector<4x8xf32>
    %9 = arith.subf %5, %8 : vector<4x8xf32>
    %10 = math.exp %9 : vector<4x8xf32>
    %cst_6 = arith.constant dense<0.000000e+00> : vector<8xf32>
    %11 = vector.multi_reduction <add>, %10, %cst_6 [0] : vector<4x8xf32> to vector<8xf32>
    %12 = vector.shape_cast %11 : vector<8xf32> to vector<1x8xf32>
    %13 = vector.broadcast %12 : vector<1x8xf32> to vector<4x8xf32>
    %14 = arith.divf %10, %13 : vector<4x8xf32>
    %c0_7 = arith.constant 0 : index
    %c0_8 = arith.constant 0 : index
    %15 = vector.load %arg4[%c0_7, %c0_8] : memref<4x8xf32, #tpu.memory_space<vmem>>, vector<4x8xf32>
    tpu.vector_store %arg4[%c0_7, %c0_8], %14 {strides = array<i32>} : memref<4x8xf32, #tpu.memory_space<vmem>>, vector<4x8xf32>,
    return
  }
  func.func @transform_0(%arg0: i32) -> (i32, i32) {
    %c0_i32 = arith.constant 0 : i32
    %c0_i32_0 = arith.constant 0 : i32
    return %arg0, %c0_i32 : i32, i32
  }
  func.func @transform_1(%arg0: i32) -> (i32, i32) {
    %c0_i32 = arith.constant 0 : i32
    %c0_i32_0 = arith.constant 0 : i32
    %c0_i32_1 = arith.constant 0 : i32
    return %c0_i32, %c0_i32_0 : i32, i32
  }
  func.func @transform_2(%arg0: i32) -> (i32, i32) {
    %c0_i32 = arith.constant 0 : i32
    %c0_i32_0 = arith.constant 0 : i32
    %c0_i32_1 = arith.constant 0 : i32
    return %c0_i32, %c0_i32_0 : i32, i32
  }
  func.func @transform_3(%arg0: i32) -> (i32, i32) {
    %c0_i32 = arith.constant 0 : i32
    %c0_i32_0 = arith.constant 0 : i32
    return %c0_i32, %arg0 : i32, i32
  }
}

</mosaic_0001>

<llo_original>
// kernel: extropic_alignment.1
$region0: #{extropic_alignment.1}
  #allocation0 [shape = 'u32[]', space=smem, size = 0x4, offset = 0x4, fixed_abs, tag = 'smem constant byte address 0x4 - core index']
  #allocation1 [shape = 'u32[144,128]{1,0:T(1,128)}', space=vmem, size = 0x12000, scoped, tag = 'internal scratch']
  %s0 = inlined_call_operand.vmem [shape: f32[8,32], index: 0, kind: input, shape index: {}]
  %s1 = inlined_call_operand.vmem [shape: f32[4,32], index: 1, kind: input, shape index: {}]
  %s2 = inlined_call_operand.vmem [shape: f32[4,1], index: 2, kind: input, shape index: {}]
  %s3 = inlined_call_operand.hbm [shape: f32[4,8], index: 3, kind: output, shape index: {}]
  %s4 = sld [smem:[#allocation0]]
  $region22: #{extropic_alignment.1} parent=0
    _
  %s6 = ssub.s32 1, %s4
  %s7 = scalar_select 0, %s6, %s4
  $region1: #{extropic_alignment.1} parent=0
    #allocation2 [shape = 'u8[2048]{0}', space=vmem, size = 0x800, scoped, tag = 'output window, operand 0, single buffered']
    #allocation3 [shape = 's32[1]{0}', space=sflag, size = 0x4, scoped, tag = 'scoped memory for extropic_alignment.1']
    %8 = vsyncpa [#allocation3], 0
    // Predicated region
    $region2: #{extropic_alignment.1} parent=1 // pred_check
      _
    $region3: #{extropic_alignment.1} parent=1 // pred_check_branch
      %10 = sbr.rel (0) target = $region5
    $region4: #{extropic_alignment.1} parent=1 // pred_region
      _
    $region5: #{extropic_alignment.1} parent=1 // pred_fallthru
      _
    // Predicated region
    $region6: #{extropic_alignment.1} parent=1 // pred_check
      _
    $region7: #{extropic_alignment.1} parent=1 // pred_check_branch
      %12 = sbr.rel (0) target = $region9
    $region8: #{extropic_alignment.1} parent=1 // pred_region
      _
    $region9: #{extropic_alignment.1} parent=1 // pred_fallthru
      _
    // Predicated region
    $region10: #{extropic_alignment.1} parent=1 // pred_check
      _
    $region11: #{extropic_alignment.1} parent=1 // pred_check_branch
      %14 = sbr.rel (0) target = $region13
    $region12: #{extropic_alignment.1} parent=1 // pred_region
      _
    $region13: #{extropic_alignment.1} parent=1 // pred_fallthru
      _
    %v15 = vld [vmem:[%s0] sm:$0xff]
    %v16 = vld [vmem:[%s1] sm:$0xf]
    %v17 = vld [vmem:[%s2] sm:$0xf]
    %19 = vset.pattern.permute.xlu0 0
    %20 = vperm.xlu0 %19, %v17
    %v21 = vpop.permute.xlu0 %20
    %vm23 = vcmask 261120
    %v25 = vsel %vm23, %v16, 0
    %v28 = vsel %vm23, %v15, 0
    %30 = vmatprep.subr.mxu0 0.0
    %31 = vmatpush1.xpose.msra.mxu0 %v28
    %32 = vmatprep.subr.mxu0 0.0
    %33 = vmatpush1.xpose.msra.mxu0 0.0
    %34 = vmatprep.subr.mxu0 0.0
    %35 = vmatpush1.xpose.msra.mxu0 0.0
    %36 = vmatprep.subr.mxu0 0.0
    %37 = vmatpush1.xpose.msra.mxu0 0.0
    %38 = vmatprep.subr.mxu0 0.0
    %39 = vmatpush1.xpose.msra.mxu0 0.0
    %40 = vmatprep.subr.mxu0 0.0
    %41 = vmatpush1.xpose.msra.mxu0 0.0
    %42 = vmatprep.subr.mxu0 0.0
    %43 = vmatpush1.xpose.msra.mxu0 0.0
    %44 = vmatprep.subr.mxu0 0.0
    %45 = vmatpush1.xpose.msra.mxu0 0.0
    %46 = vmatprep.subr.mxu0 0.0
    %47 = vmatpush1.xpose.msra.mxu0 0.0
    %48 = vmatprep.subr.mxu0 0.0
    %49 = vmatpush1.xpose.msra.mxu0 0.0
    %50 = vmatprep.subr.mxu0 0.0
    %51 = vmatpush1.xpose.msra.mxu0 0.0
    %52 = vmatprep.subr.mxu0 0.0
    %53 = vmatpush1.xpose.msra.mxu0 0.0
    %54 = vmatprep.subr.mxu0 0.0
    %55 = vmatpush1.xpose.msra.mxu0 0.0
    %56 = vmatprep.subr.mxu0 0.0
    %57 = vmatpush1.xpose.msra.mxu0 0.0
    %58 = vmatprep.subr.mxu0 0.0
    %59 = vmatpush1.xpose.msra.mxu0 0.0
    %60 = vmatprep.subr.mxu0 0.0
    %61 = vmatpush1.xpose.msra.mxu0 0.0
    %62 = vmatprep.subr.mxu0 0.0
    %63 = vmatpush1.xpose.msra.mxu0 0.0
    %64 = vmatprep.subr.mxu0 0.0
    %65 = vmatpush1.xpose.msra.mxu0 0.0
    %66 = vmatprep.subr.mxu0 0.0
    %67 = vmatpush1.xpose.msra.mxu0 0.0
    %68 = vmatprep.subr.mxu0 0.0
    %69 = vmatpush1.xpose.msra.mxu0 0.0
    %70 = vmatprep.subr.mxu0 0.0
    %71 = vmatpush1.xpose.msra.mxu0 0.0
    %72 = vmatprep.subr.mxu0 0.0
    %73 = vmatpush1.xpose.msra.mxu0 0.0
    %74 = vmatprep.subr.mxu0 0.0
    %75 = vmatpush1.xpose.msra.mxu0 0.0
    %76 = vmatprep.subr.mxu0 0.0
    %77 = vmatpush1.xpose.msra.mxu0 0.0
    %78 = vmatprep.subr.mxu0 0.0
    %79 = vmatpush1.xpose.msra.mxu0 0.0
    %80 = vmatprep.subr.mxu0 0.0
    %81 = vmatpush1.xpose.msra.mxu0 0.0
    %82 = vmatprep.subr.mxu0 0.0
    %83 = vmatpush1.xpose.msra.mxu0 0.0
    %84 = vmatprep.subr.mxu0 0.0
    %85 = vmatpush1.xpose.msra.mxu0 0.0
    %86 = vmatprep.subr.mxu0 0.0
    %87 = vmatpush1.xpose.msra.mxu0 0.0
    %88 = vmatprep.subr.mxu0 0.0
    %89 = vmatpush1.xpose.msra.mxu0 0.0
    %90 = vmatprep.subr.mxu0 0.0
    %91 = vmatpush1.xpose.msra.mxu0 0.0
    %92 = vmatprep.subr.mxu0 0.0
    %93 = vmatpush1.xpose.msra.mxu0 0.0
    %94 = vmatprep.mubr.f32.mxu0 0.0
    %95 = vmatmul.mubr.f32.gmra.mrb[0].mxu0 %v25
    %v96 = vpop.f32.mrb[0].mxu0
    %v97 = vadd.f32 %v21, %v96
    %v98 = vpop.f32.mrb[0].mxu0
    %99 = vdwg.mxu0
    %vm100 = vcmask 60416
    %v101 = vsel %vm100, %v97, -inf
    %v102 = vrot.slane %v101, 4
    %v103 = vmax.f32 %v101, %v102
    %v104 = vrot.slane %v103, 2
    %v105 = vmax.f32 %v103, %v104
    %v106 = vrot.slane %v105, 1
    %v107 = vmax.f32 %v105, %v106
    %v108 = vsub.f32 %v97, %v107
    %v109 = vmul.f32 %v108, 1.442695
    %v110 = vpow.pop %v109
    %v111 = vsel %vm100, %v110, 0.0
    %v112 = vrot.slane %v111, 4
    %v113 = vadd.f32 %v111, %v112
    %v114 = vrot.slane %v113, 2
    %v115 = vadd.f32 %v113, %v114
    %v116 = vrot.slane %v115, 1
    %v117 = vadd.f32 %v115, %v116
    %v118 = vrcp.pop %v117
    %v119 = vmul.f32 %v110, %v118
    %120 = vst.msk [vmem:[#allocation2] sm:$0xf] %vm100, %v119
    // Predicated region
    $region14: #{extropic_alignment.1} parent=1 // pred_check
      _
    $region15: #{extropic_alignment.1} parent=1 // pred_check_branch
      %122 = sbr.rel (0) target = $region17
    $region16: #{extropic_alignment.1} parent=1 // pred_region
      %s124 = ssub.s32 64, 64
      %125 = vsyncadd [#allocation3], %s124
      %s127 = sshll.u32 [#allocation2], 4
      %s128 = int_to_ptr.vmem [resolvable:$true] %s127
      %130 = dma.vmem_to_hbm [thread:$0]  %s128, 64, %s3, [#allocation3]
    $region17: #{extropic_alignment.1} parent=1 // pred_fallthru
      _
    // Predicated region
    $region18: #{extropic_alignment.1} parent=1 // pred_check
      _
    $region19: #{extropic_alignment.1} parent=1 // pred_check_branch
      %132 = sbr.rel (0) target = $region21
    $region20: #{extropic_alignment.1} parent=1 // pred_region
      %133 = dma.done [#allocation3], 64
    $region21: #{extropic_alignment.1} parent=1 // pred_fallthru
      _
    %134 = vsyncpa [#allocation3], 1

</llo_original>
